<compile_context>
chip_gen: v7x
topology: tpu7x:2x2x1
jax: 0.10.0
libtpu: 0.0.40
codegen_flags: <defaults>
</compile_context>

<pallas_src>
import functools

import jax
import jax.numpy as jnp
from jax.experimental import pallas as pl
from jax.experimental.pallas import tpu as pltpu


def _round_up(x, m):
    return (x + m - 1) // m * m


def _supcon_tile_math(logits, pos, valid, not_diag, out_ref):
    """Shared per-tile SupCon math.

    logits:   [TM, Np] f32 (already divided by temperature)
    pos:      [TM, Np] f32 positive-pair mask (diag / padding not yet removed)
    valid:    [TM, Np] bool, True for real (non-padded) contrast columns
    not_diag: [TM, Np] bool, True off the global diagonal
    """
    keep = jnp.logical_and(valid, not_diag)

    # Row max over all *valid* columns (incl. the diagonal), like the torch code.
    row_max = jnp.max(jnp.where(valid, logits, jnp.float32(-1e30)),
                      axis=1, keepdims=True)
    shifted = logits - row_max

    exp_l = jnp.where(keep, jnp.exp(shifted), 0.0)
    log_denom = jnp.log(jnp.sum(exp_l, axis=1, keepdims=True))
    log_prob = shifted - log_denom

    m = jnp.where(keep, pos, 0.0)
    pos_sum = jnp.sum(m * log_prob, axis=1, keepdims=True)   # [TM, 1]
    pos_cnt = jnp.sum(m, axis=1, keepdims=True)              # [TM, 1]

    # NaN if an anchor row has no positives -- matches the PyTorch reference.
    mean_log_prob_pos = pos_sum / pos_cnt

    # Lane-dense (TM, 128) store; wrapper reads column 0 of the real rows.
    out_ref[...] = jnp.broadcast_to(mean_log_prob_pos, out_ref.shape)


def _supcon_labels_kernel(a_lab_ref, c_lab_ref, anchor_ref, contrast_ref,
                          out_ref, *, inv_temp, n_valid, tm):
    # [TM, D_pad] @ [D_pad, N_pad] -> [TM, N_pad] on the MXU, f32 accumulate.
    logits = jnp.dot(anchor_ref[...], contrast_ref[...],
                     preferred_element_type=jnp.float32) * inv_temp
    tm_blk, np_blk = logits.shape

    row_g = (pl.program_id(0) * tm
             + jax.lax.broadcasted_iota(jnp.int32, (tm_blk, np_blk), 0))
    col_g = jax.lax.broadcasted_iota(jnp.int32, (tm_blk, np_blk), 1)
    valid = col_g < n_valid          # drop padded contrast columns
    not_diag = row_g != col_g        # global-index diagonal (self-contrast)

    # Positive-pair mask rebuilt in-kernel from label vectors (no [A,N] DMA).
    pos = (a_lab_ref[...] == c_lab_ref[...]).astype(jnp.float32)

    _supcon_tile_math(logits, pos, valid, not_diag, out_ref)


def _supcon_mask_kernel(anchor_ref, contrast_ref, mask_ref, out_ref,
                        *, inv_temp, n_valid, tm):
    logits = jnp.dot(anchor_ref[...], contrast_ref[...],
                     preferred_element_type=jnp.float32) * inv_temp
    tm_blk, np_blk = logits.shape

    row_g = (pl.program_id(0) * tm
             + jax.lax.broadcasted_iota(jnp.int32, (tm_blk, np_blk), 0))
    col_g = jax.lax.broadcasted_iota(jnp.int32, (tm_blk, np_blk), 1)
    valid = col_g < n_valid
    not_diag = row_g != col_g

    pos = mask_ref[...].astype(jnp.float32)   # bf16 tile -> f32 in-register

    _supcon_tile_math(logits, pos, valid, not_diag, out_ref)


def supcon_loss(features, labels=None, mask=None, *, temperature=0.1,
                contrast_mode="all", normalize=True,
                compute_dtype=jnp.bfloat16):
    """JAX/Pallas equivalent of SupConLoss.forward.

    features: [bsz, n_views, ...]  (flattened to [bsz, n_views, D])
    labels:   optional [bsz] int labels
    mask:     optional [bsz, bsz] float mask
    """
    if features.ndim < 3:
        raise ValueError("`features` needs to be [bsz, n_views, ...]")
    if labels is not None and mask is not None:
        raise ValueError("Cannot define both `labels` and `mask`")

    bsz, n_views = features.shape[0], features.shape[1]
    feats = features.reshape(bsz, n_views, -1).astype(jnp.float32)

    if normalize:
        nrm = jnp.sqrt(jnp.sum(feats * feats, axis=2, keepdims=True))
        feats = feats / jnp.maximum(nrm, 1e-12)   # matches F.normalize eps

    d = feats.shape[-1]
    n = n_views * bsz
    # contrast_feature = cat(unbind(features, dim=1), dim=0) -> view-major [N, D]
    contrast_nd = jnp.transpose(feats, (1, 0, 2)).reshape(n, d)

    if contrast_mode == "one":
        anchor_nd = feats[:, 0]
        anchor_count = 1
    elif contrast_mode == "all":
        anchor_nd = contrast_nd
        anchor_count = n_views
    else:
        raise ValueError(f"Unknown mode: {contrast_mode}")
    a = anchor_count * bsz

    # ---- padding / tiling geometry (zero-pad D is exact after normalization)
    d_pad = _round_up(d, 128)
    n_pad = _round_up(n, 128)
    # Keep a single [TM, N_pad] f32 intermediate <= ~4 MiB; TM multiple of 8.
    tm_cap = max(8, min(512, (4 * 2 ** 20) // (n_pad * 4)))
    tm_cap = max(8, (tm_cap // 8) * 8)
    tm = min(tm_cap, _round_up(a, 8))
    a_pad = _round_up(a, tm)
    grid = (a_pad // tm,)

    # Anchor [A_pad, D_pad]; contrast pre-transposed to lane-dense [D_pad, N_pad].
    anchor_p = jnp.zeros((a_pad, d_pad), jnp.float32).at[:a, :d].set(anchor_nd)
    contrast_p = jnp.zeros((n_pad, d_pad), jnp.float32).at[:n, :d].set(contrast_nd)
    contrast_dn = jnp.transpose(contrast_p, (1, 0)).astype(compute_dtype)
    anchor_p = anchor_p.astype(compute_dtype)

    feat_bytes = jnp.dtype(compute_dtype).itemsize
    vmem_est = (2 * tm * d_pad * feat_bytes       # double-buffered anchor tiles
                + 2 * d_pad * n_pad * feat_bytes  # resident contrast
                + 2 * tm * 128 * 4                # output tiles
                + 8 * tm * n_pad * 4)             # in-kernel [TM, N_pad] temps

    anchor_spec = pl.BlockSpec((tm, d_pad), lambda i: (i, 0))
    contrast_spec = pl.BlockSpec((d_pad, n_pad), lambda i: (0, 0))
    out_spec = pl.BlockSpec((tm, 128), lambda i: (i, 0))
    out_shape = jax.ShapeDtypeStruct((a_pad, 128), jnp.float32)

    if mask is None:
        # Labels path (also covers SimCLR, where labels == sample index).
        if labels is None:
            sample_ids = jnp.arange(bsz, dtype=jnp.int32)
        else:
            sample_ids = jnp.asarray(labels).reshape(-1).astype(jnp.int32)
            if sample_ids.shape[0] != bsz:
                raise ValueError("Num of labels does not match num of features")
        c_lab = (jnp.full((n_pad,), -2, jnp.int32)
                 .at[:n].set(jnp.tile(sample_ids, n_views))
                 .reshape(1, n_pad))
        a_lab = (jnp.full((a_pad,), -1, jnp.int32)
                 .at[:a].set(jnp.tile(sample_ids, anchor_count))
                 .reshape(a_pad, 1))
        kernel = functools.partial(_supcon_labels_kernel,
                                   inv_temp=1.0 / temperature, n_valid=n, tm=tm)
        inputs = (a_lab, c_lab, anchor_p, contrast_dn)
        in_specs = [pl.BlockSpec((tm, 1), lambda i: (i, 0)),
                    pl.BlockSpec((1, n_pad), lambda i: (0, 0)),
                    anchor_spec, contrast_spec]
        vmem_est += 2 * (tm * 4 + n_pad * 4)
    else:
        # Arbitrary (possibly asymmetric) user mask: ship it tiled as bf16.
        base = jnp.asarray(mask).astype(jnp.float32)
        full = jnp.tile(base, (anchor_count, n_views))
        mask_p = (jnp.zeros((a_pad, n_pad), jnp.float32)
                  .at[:a, :n].set(full).astype(jnp.bfloat16))
        kernel = functools.partial(_supcon_mask_kernel,
                                   inv_temp=1.0 / temperature, n_valid=n, tm=tm)
        inputs = (anchor_p, contrast_dn, mask_p)
        in_specs = [anchor_spec, contrast_spec,
                    pl.BlockSpec((tm, n_pad), lambda i: (i, 0))]
        vmem_est += 2 * tm * n_pad * 2

    vmem_limit = int(min(48 * 2 ** 20, max(32 * 2 ** 20, 2 * vmem_est)))

    mean_log_prob_pos = pl.pallas_call(
        kernel,
        out_shape=out_shape,
        grid=grid,
        in_specs=in_specs,
        out_specs=out_spec,
        compiler_params=pltpu.CompilerParams(
            dimension_semantics=("parallel",),
            vmem_limit_bytes=vmem_limit),
    )(*inputs)

    # loss = -mean over all (anchor_count * bsz) anchors; drop padded rows.
    return -jnp.mean(mean_log_prob_pos[:a, 0])


def _supcon_loss_ref(features, labels=None, mask=None, *, temperature=0.1,
                     contrast_mode="all", normalize=True):
    """Pure-JAX f32 reference mirroring the PyTorch code, for verification."""
    bsz, n_views = features.shape[0], features.shape[1]
    feats = features.reshape(bsz, n_views, -1).astype(jnp.float32)
    if normalize:
        nrm = jnp.sqrt(jnp.sum(feats * feats, axis=2, keepdims=True))
        feats = feats / jnp.maximum(nrm, 1e-12)
    if labels is None and mask is None:
        m = jnp.eye(bsz, dtype=jnp.float32)
    elif labels is not None:
        lab = labels.reshape(-1, 1)
        m = (lab == lab.T).astype(jnp.float32)
    else:
        m = mask.astype(jnp.float32)
    contrast = jnp.transpose(feats, (1, 0, 2)).reshape(n_views * bsz, -1)
    if contrast_mode == "one":
        anchor, anchor_count = feats[:, 0], 1
    else:
        anchor, anchor_count = contrast, n_views
    adc = (anchor @ contrast.T) / temperature
    logits = adc - jnp.max(adc, axis=1, keepdims=True)
    m = jnp.tile(m, (anchor_count, n_views))
    a = bsz * anchor_count
    logits_mask = jnp.ones_like(m).at[jnp.arange(a), jnp.arange(a)].set(0.0)
    m = m * logits_mask
    exp_logits = jnp.exp(logits) * logits_mask
    log_prob = logits - jnp.log(jnp.sum(exp_logits, axis=1, keepdims=True))
    mean_log_prob_pos = jnp.sum(m * log_prob, axis=1) / jnp.sum(m, axis=1)
    return -jnp.mean(mean_log_prob_pos)


if __name__ == "__main__":
    key = jax.random.PRNGKey(0)
    bsz, n_views, dim = 8, 2, 32
    features = jax.random.normal(key, (bsz, n_views, dim), dtype=jnp.float32)
    labels = jnp.array([0, 1, 2, 3, 0, 1, 2, 3], dtype=jnp.int32)
    mask = (labels.reshape(-1, 1) == labels.reshape(1, -1)).astype(jnp.float32)

    # SimCLR (unsupervised) path, bf16 compute.
    out_unsup = jax.block_until_ready(supcon_loss(features))
    ref_unsup = _supcon_loss_ref(features)
    assert jnp.allclose(out_unsup, ref_unsup, atol=1e-1, rtol=5e-2), (out_unsup, ref_unsup)

    # Supervised (labels) path, bf16 compute.
    out_sup = jax.block_until_ready(supcon_loss(features, labels=labels))
    ref_sup = _supcon_loss_ref(features, labels=labels)
    assert jnp.allclose(out_sup, ref_sup, atol=1e-1, rtol=5e-2), (out_sup, ref_sup)

    # Explicit-mask path (should match the labels-based result).
    out_mask = jax.block_until_ready(supcon_loss(features, mask=mask))
    assert jnp.allclose(out_mask, ref_sup, atol=1e-1, rtol=5e-2), (out_mask, ref_sup)

    # contrast_mode='one', f32 compute path.
    out_one = jax.block_until_ready(
        supcon_loss(features, labels=labels, contrast_mode="one",
                    compute_dtype=jnp.float32))
    ref_one = _supcon_loss_ref(features, labels=labels, contrast_mode="one")
    assert jnp.allclose(out_one, ref_one, atol=1e-1, rtol=5e-2), (out_one, ref_one)

    print("KERNEL_OK")
</pallas_src>

<mosaic_0001>
module attributes {stable_mosaic.version = 11 : i64} {
  func.func @_supcon_labels_kernel(%arg0: i32, %arg1: memref<16x1xi32, #tpu.memory_space<vmem>>, %arg2: memref<1x128xi32, #tpu.memory_space<vmem>>, %arg3: memref<16x128xbf16, #tpu.memory_space<vmem>>, %arg4: memref<128x128xbf16, #tpu.memory_space<vmem>>, %arg5: memref<16x128xf32, #tpu.memory_space<vmem>>) attributes {dimension_semantics = [#tpu.dimension_semantics<parallel>], iteration_bounds = array<i64: 1>, scalar_prefetch = 0 : i64, scratch_operands = 0 : i64, tpu.core_type = #tpu.core_type<tc>, window_params = [{transform_indices = @transform_0, window_bounds = array<i64: 16, 1>}, {pipeline_mode = #tpu.pipeline_mode<synchronous>, transform_indices = @transform_1, window_bounds = array<i64: 1, 128>}, {transform_indices = @transform_2, window_bounds = array<i64: 16, 128>}, {pipeline_mode = #tpu.pipeline_mode<synchronous>, transform_indices = @transform_3, window_bounds = array<i64: 128, 128>}, {transform_indices = @transform_4, window_bounds = array<i64: 16, 128>}]} {
    %c0 = arith.constant 0 : index
    %c0_0 = arith.constant 0 : index
    %0 = vector.load %arg3[%c0, %c0_0] : memref<16x128xbf16, #tpu.memory_space<vmem>>, vector<16x128xbf16>
    %c0_1 = arith.constant 0 : index
    %c0_2 = arith.constant 0 : index
    %1 = vector.load %arg4[%c0_1, %c0_2] : memref<128x128xbf16, #tpu.memory_space<vmem>>, vector<128x128xbf16>
    %cst = arith.constant dense<0.000000e+00> : vector<16x128xf32>
    %2 = tpu.matmul %0, %1, %cst {dimension_numbers = #tpu.dot_dimension_numbers<[1], [0], [0], [1], [0, 0, 1, 1], [], []>} : vector<16x128xbf16>, vector<128x128xbf16>, vector<16x128xf32> -> vector<16x128xf32>
    %cst_3 = arith.constant 1.000000e+01 : f32
    %3 = vector.broadcast %cst_3 : f32 to vector<16x128xf32>
    %4 = arith.mulf %2, %3 : vector<16x128xf32>
    %c16_i32 = arith.constant 16 : i32
    %5 = arith.muli %arg0, %c16_i32 : i32
    %6 = tpu.iota {dimensions = array<i32: 0>} : vector<16x128xi32>
    %7 = vector.broadcast %5 : i32 to vector<16x128xi32>
    %8 = arith.addi %7, %6 : vector<16x128xi32>
    %9 = tpu.iota {dimensions = array<i32: 1>} : vector<16x128xi32>
    %c16_i32_4 = arith.constant 16 : i32
    %10 = vector.broadcast %c16_i32_4 : i32 to vector<16x128xi32>
    %11 = arith.cmpi slt, %9, %10 : vector<16x128xi32>
    %12 = arith.cmpi ne, %8, %9 : vector<16x128xi32>
    %c0_5 = arith.constant 0 : index
    %c0_6 = arith.constant 0 : index
    %13 = vector.load %arg1[%c0_5, %c0_6] : memref<16x1xi32, #tpu.memory_space<vmem>>, vector<16x1xi32>
    %c0_7 = arith.constant 0 : index
    %c0_8 = arith.constant 0 : index
    %14 = vector.load %arg2[%c0_7, %c0_8] : memref<1x128xi32, #tpu.memory_space<vmem>>, vector<1x128xi32>
    %15 = vector.broadcast %13 : vector<16x1xi32> to vector<16x128xi32>
    %16 = vector.broadcast %14 : vector<1x128xi32> to vector<16x128xi32>
    %17 = arith.cmpi eq, %15, %16 : vector<16x128xi32>
    %18 = arith.extui %17 : vector<16x128xi1> to vector<16x128xi32>
    %19 = arith.sitofp %18 : vector<16x128xi32> to vector<16x128xf32>
    %20 = arith.andi %11, %12 : vector<16x128xi1>
    %cst_9 = arith.constant -1.000000e+30 : f32
    %21 = vector.broadcast %cst_9 : f32 to vector<16x128xf32>
    %22 = arith.select %11, %4, %21 : vector<16x128xi1>, vector<16x128xf32>
    %cst_10 = arith.constant dense<0xFF800000> : vector<16xf32>
    %23 = vector.multi_reduction <maximumf>, %22, %cst_10 [1] : vector<16x128xf32> to vector<16xf32>
    %24 = vector.shape_cast %23 : vector<16xf32> to vector<16x1xf32>
    %25 = vector.broadcast %24 : vector<16x1xf32> to vector<16x128xf32>
    %26 = arith.subf %4, %25 : vector<16x128xf32>
    %27 = math.exp %26 : vector<16x128xf32>
    %cst_11 = arith.constant 0.000000e+00 : f32
    %28 = vector.broadcast %cst_11 : f32 to vector<16x128xf32>
    %29 = arith.select %20, %27, %28 : vector<16x128xi1>, vector<16x128xf32>
    %cst_12 = arith.constant dense<0.000000e+00> : vector<16xf32>
    %30 = vector.multi_reduction <add>, %29, %cst_12 [1] : vector<16x128xf32> to vector<16xf32>
    %31 = vector.shape_cast %30 : vector<16xf32> to vector<16x1xf32>
    %32 = math.log %31 : vector<16x1xf32>
    %33 = vector.broadcast %32 : vector<16x1xf32> to vector<16x128xf32>
    %34 = arith.subf %26, %33 : vector<16x128xf32>
    %cst_13 = arith.constant 0.000000e+00 : f32
    %35 = vector.broadcast %cst_13 : f32 to vector<16x128xf32>
    %36 = arith.select %20, %19, %35 : vector<16x128xi1>, vector<16x128xf32>
    %37 = arith.mulf %36, %34 : vector<16x128xf32>
    %cst_14 = arith.constant dense<0.000000e+00> : vector<16xf32>
    %38 = vector.multi_reduction <add>, %37, %cst_14 [1] : vector<16x128xf32> to vector<16xf32>
    %39 = vector.shape_cast %38 : vector<16xf32> to vector<16x1xf32>
    %cst_15 = arith.constant dense<0.000000e+00> : vector<16xf32>
    %40 = vector.multi_reduction <add>, %36, %cst_15 [1] : vector<16x128xf32> to vector<16xf32>
    %41 = vector.shape_cast %40 : vector<16xf32> to vector<16x1xf32>
    %42 = arith.divf %39, %41 : vector<16x1xf32>
    %43 = vector.shape_cast %42 : vector<16x1xf32> to vector<16x1xf32>
    %44 = vector.broadcast %43 : vector<16x1xf32> to vector<16x128xf32>
    %c0_16 = arith.constant 0 : index
    %c0_17 = arith.constant 0 : index
    %45 = vector.load %arg5[%c0_16, %c0_17] : memref<16x128xf32, #tpu.memory_space<vmem>>, vector<16x128xf32>
    tpu.vector_store %arg5[%c0_16, %c0_17], %44 {strides = array<i32>} : memref<16x128xf32, #tpu.memory_space<vmem>>, vector<16x128xf32>,
    return
  }
  func.func @transform_0(%arg0: i32) -> (i32, i32) {
    %c0_i32 = arith.constant 0 : i32
    %c0_i32_0 = arith.constant 0 : i32
    return %arg0, %c0_i32 : i32, i32
  }
  func.func @transform_1(%arg0: i32) -> (i32, i32) {
    %c0_i32 = arith.constant 0 : i32
    %c0_i32_0 = arith.constant 0 : i32
    %c0_i32_1 = arith.constant 0 : i32
    return %c0_i32, %c0_i32_0 : i32, i32
  }
  func.func @transform_2(%arg0: i32) -> (i32, i32) {
    %c0_i32 = arith.constant 0 : i32
    %c0_i32_0 = arith.constant 0 : i32
    return %arg0, %c0_i32 : i32, i32
  }
  func.func @transform_3(%arg0: i32) -> (i32, i32) {
    %c0_i32 = arith.constant 0 : i32
    %c0_i32_0 = arith.constant 0 : i32
    %c0_i32_1 = arith.constant 0 : i32
    return %c0_i32, %c0_i32_0 : i32, i32
  }
  func.func @transform_4(%arg0: i32) -> (i32, i32) {
    %c0_i32 = arith.constant 0 : i32
    %c0_i32_0 = arith.constant 0 : i32
    return %arg0, %c0_i32 : i32, i32
  }
}

</mosaic_0001>

<llo_original>
// kernel: tpu_custom_call.1
$region0: #{tpu_custom_call.1}
  #allocation0 [shape = 'u32[]', space=smem, size = 0x4, offset = 0x4, fixed_abs, tag = 'smem constant byte address 0x4 - core index']
  #allocation1 [shape = 'u32[144,128]{1,0:T(1,128)}', space=vmem, size = 0x12000, scoped, tag = 'internal scratch']
  %s0 = inlined_call_operand.vmem [shape: s32[16,1], index: 0, kind: input, shape index: {}]
  %s1 = inlined_call_operand.vmem [shape: s32[1,128], index: 1, kind: input, shape index: {}]
  %s2 = inlined_call_operand.vmem [shape: bf16[16,128], index: 2, kind: input, shape index: {}]
  %s3 = inlined_call_operand.hbm [shape: bf16[128,128], index: 3, kind: input, shape index: {}]
  %s4 = inlined_call_operand.hbm [shape: f32[16,128], index: 4, kind: output, shape index: {}]
  %s5 = sld [smem:[#allocation0]]
  $region30: #{tpu_custom_call.1} parent=0
    _
  %s7 = ssub.s32 1, %s5
  %s8 = scalar_select 0, %s7, %s5
  $region1: #{tpu_custom_call.1} parent=0
    #allocation2 [shape = 'u8[32768]{0}', space=vmem, size = 0x8000, scoped, tag = 'input window, operand 3, single buffered']
    #allocation3 [shape = 's32[1]{0}', space=sflag, size = 0x4, scoped, tag = 'scoped memory for tpu_custom_call.1']
    #allocation4 [shape = 's32[1]{0}', space=sflag, size = 0x4, scoped, tag = 'scoped memory for tpu_custom_call.1']
    #allocation5 [shape = 'u8[8192]{0}', space=vmem, size = 0x2000, scoped, tag = 'output window, operand 0, single buffered']
    %9 = vsyncpa [#allocation3], 0
    %10 = vsyncpa [#allocation4], 0
    // Predicated region
    $region2: #{tpu_custom_call.1} parent=1 // pred_check
      _
    $region3: #{tpu_custom_call.1} parent=1 // pred_check_branch
      %12 = sbr.rel (0) target = $region5
    $region4: #{tpu_custom_call.1} parent=1 // pred_region
      _
    $region5: #{tpu_custom_call.1} parent=1 // pred_fallthru
      _
    // Predicated region
    $region6: #{tpu_custom_call.1} parent=1 // pred_check
      _
    $region7: #{tpu_custom_call.1} parent=1 // pred_check_branch
      %14 = sbr.rel (0) target = $region9
    $region8: #{tpu_custom_call.1} parent=1 // pred_region
      _
    $region9: #{tpu_custom_call.1} parent=1 // pred_fallthru
      _
    // Predicated region
    $region10: #{tpu_custom_call.1} parent=1 // pred_check
      _
    $region11: #{tpu_custom_call.1} parent=1 // pred_check_branch
      %16 = sbr.rel (0) target = $region13
    $region12: #{tpu_custom_call.1} parent=1 // pred_region
      _
    $region13: #{tpu_custom_call.1} parent=1 // pred_fallthru
      _
    // Predicated region
    $region14: #{tpu_custom_call.1} parent=1 // pred_check
      _
    $region15: #{tpu_custom_call.1} parent=1 // pred_check_branch
      %18 = sbr.rel (0) target = $region17
    $region16: #{tpu_custom_call.1} parent=1 // pred_region
      %s20 = ssub.s32 1024, 1024
      %21 = vsyncadd [#allocation3], %s20
      %s22 = sshll.u32 [#allocation2], 4
      %s23 = int_to_ptr.vmem [resolvable:$true] %s22
      %28 = dma.hbm_to_vmem [thread:$0]  %s3, 1024, %s23, [#allocation3], 64, 64, 4
    $region17: #{tpu_custom_call.1} parent=1 // pred_fallthru
      _
    // Predicated region
    $region18: #{tpu_custom_call.1} parent=1 // pred_check
      _
    $region19: #{tpu_custom_call.1} parent=1 // pred_check_branch
      %30 = sbr.rel (0) target = $region21
    $region20: #{tpu_custom_call.1} parent=1 // pred_region
      %31 = dma.done [#allocation3], 1024
    $region21: #{tpu_custom_call.1} parent=1 // pred_fallthru
      _
    %v33 = vld [vmem:[%s2] sm:$0xf]
    %v34 = vld [vmem:[%s2 + $0x4] sm:$0xf]
    %v35 = vld [vmem:[#allocation2] sm:$0xf]
    %v36 = vld [vmem:[#allocation2 + $0x4] sm:$0xf]
    %v37 = vld [vmem:[#allocation2 + $0x8] sm:$0xf]
    %v38 = vld [vmem:[#allocation2 + $0xc] sm:$0xf]
    %v39 = vld [vmem:[#allocation2 + $0x10] sm:$0xf]
    %v40 = vld [vmem:[#allocation2 + $0x14] sm:$0xf]
    %v41 = vld [vmem:[#allocation2 + $0x18] sm:$0xf]
    %v42 = vld [vmem:[#allocation2 + $0x1c] sm:$0xf]
    %v43 = vld [vmem:[#allocation2 + $0x20] sm:$0xf]
    %v44 = vld [vmem:[#allocation2 + $0x24] sm:$0xf]
    %v45 = vld [vmem:[#allocation2 + $0x28] sm:$0xf]
    %v46 = vld [vmem:[#allocation2 + $0x2c] sm:$0xf]
    %v47 = vld [vmem:[#allocation2 + $0x30] sm:$0xf]
    %v48 = vld [vmem:[#allocation2 + $0x34] sm:$0xf]
    %v49 = vld [vmem:[#allocation2 + $0x38] sm:$0xf]
    %v50 = vld [vmem:[#allocation2 + $0x3c] sm:$0xf]
    %v53 = vunpack.c.l.b16 %v33
    %v54 = vunpack.c.l.b16 %v34
    %v55 = vpack.c.b16 %v54, %v53
    %v73 = vunpack.c.l.b16 %v35
    %v74 = vunpack.c.l.b16 %v36
    %v75 = vunpack.c.l.b16 %v37
    %v76 = vunpack.c.l.b16 %v38
    %v77 = vunpack.c.l.b16 %v39
    %v78 = vunpack.c.l.b16 %v40
    %v79 = vunpack.c.l.b16 %v41
    %v80 = vunpack.c.l.b16 %v42
    %v81 = vunpack.c.l.b16 %v43
    %v82 = vunpack.c.l.b16 %v44
    %v83 = vunpack.c.l.b16 %v45
    %v84 = vunpack.c.l.b16 %v46
    %v85 = vunpack.c.l.b16 %v47
    %v86 = vunpack.c.l.b16 %v48
    %v87 = vunpack.c.l.b16 %v49
    %v88 = vunpack.c.l.b16 %v50
    %v89 = vpack.c.b16 %v74, %v73
    %v90 = vpack.c.b16 %v76, %v75
    %v91 = vpack.c.b16 %v78, %v77
    %v92 = vpack.c.b16 %v80, %v79
    %v93 = vpack.c.b16 %v82, %v81
    %v94 = vpack.c.b16 %v84, %v83
    %v95 = vpack.c.b16 %v86, %v85
    %v96 = vpack.c.b16 %v88, %v87
    %105 = vmatprep.subr.bf16.mxu0 0
    %106 = vmatpush1.bf16.msra.mxu0 %v89
    %107 = vmatprep.subr.bf16.mxu0 0
    %108 = vmatpush1.bf16.msra.mxu0 %v90
    %109 = vmatprep.subr.bf16.mxu0 0
    %110 = vmatpush1.bf16.msra.mxu0 %v91
    %111 = vmatprep.subr.bf16.mxu0 0
    %112 = vmatpush1.bf16.msra.mxu0 %v92
    %113 = vmatprep.subr.bf16.mxu0 0
    %114 = vmatpush1.bf16.msra.mxu0 %v93
    %115 = vmatprep.subr.bf16.mxu0 0
    %116 = vmatpush1.bf16.msra.mxu0 %v94
    %117 = vmatprep.subr.bf16.mxu0 0
    %118 = vmatpush1.bf16.msra.mxu0 %v95
    %119 = vmatprep.subr.bf16.mxu0 0
    %120 = vmatpush1.bf16.msra.mxu0 %v96
    %121 = vmatprep.subr.bf16.mxu0 0
    %122 = vmatpush1.bf16.msra.mxu0 0
    %123 = vmatprep.subr.bf16.mxu0 0
    %124 = vmatpush1.bf16.msra.mxu0 0
    %125 = vmatprep.subr.bf16.mxu0 0
    %126 = vmatpush1.bf16.msra.mxu0 0
    %127 = vmatprep.subr.bf16.mxu0 0
    %128 = vmatpush1.bf16.msra.mxu0 0
    %129 = vmatprep.subr.bf16.mxu0 0
    %130 = vmatpush1.bf16.msra.mxu0 0
    %131 = vmatprep.subr.bf16.mxu0 0
    %132 = vmatpush1.bf16.msra.mxu0 0
    %133 = vmatprep.subr.bf16.mxu0 0
    %134 = vmatpush1.bf16.msra.mxu0 0
    %135 = vmatprep.subr.bf16.mxu0 0
    %136 = vmatpush1.bf16.msra.mxu0 0
    %137 = vmatprep.mubr.bf16.mxu0 0
    %138 = vmatmul.mubr.bf16.gmra.mrb[0].mxu0 %v55
    %v139 = vpop.f32.mrb[0].mxu0
    %v140 = vadd.f32 0.0, %v139
    %v141 = vpop.f32.mrb[0].mxu0
    %v142 = vpop.f32.mrb[0].mxu0
    %v143 = vadd.f32 0.0, %v142
    %v144 = vpop.f32.mrb[0].mxu0
    %145 = vdwg.mxu0
    %v146 = vmul.f32 %v140, 10.0
    %v147 = vmul.f32 %v143, 10.0
    %s148 = smul.u32 0, 16
    %v149 = vlaneseq
    %v150 = vshrl.u32 %v149, 7
    %v151 = vadd.s32 %v150, 8
    %v152 = vstv %s148
    %v153 = vadd.s32 %v152, %v150
    %v154 = vadd.s32 %v152, %v151
    %v155 = vlaneseq
    %v156 = vand.u32 %v155, 127
    %vm157 = vcmp.lt.s32.totalorder %v156, 16
    %vm158 = vcmp.ne.s32.totalorder %v153, %v156
    %vm159 = vcmp.ne.s32.totalorder %v154, %v156
    %v160 = vld [vmem:[%s0] sm:$0xff]
    %v161 = vld [vmem:[%s0 + $0x8] sm:$0xff]
    %v162 = vld [vmem:[%s1] sm:$0x1]
    %163 = vset.pattern.permute.xlu0 0
    %164 = vperm.xlu0 %163, %v160
    %v165 = vpop.permute.xlu0 %164
    %166 = vset.pattern.permute.xlu0 0
    %167 = vperm.xlu0 %166, %v161
    %v168 = vpop.permute.xlu0 %167
    %v169 = vlaneseq
    %v170 = vshrl.u32 %v169, 7
    %v171 = vsub.s32 0, %v170
    %v172 = vrot.slane %v162, %v171
    %vm173 = vcmp.eq.s32.totalorder %v165, %v172
    %vm174 = vcmp.eq.s32.totalorder %v168, %v172
    %v175 = vsel %vm173, 1, 0
    %v176 = vsel %vm174, 1, 0
    %v177 = vcvt.s32.f32 %v175
    %v178 = vcvt.s32.f32 %v176
    %vm179 = vmand %vm157, %vm158
    %vm180 = vmand %vm157, %vm159
    %v181 = vsel %vm157, %v146, -1e+30
    %v182 = vsel %vm157, %v147, -1e+30
    %183 = vmax.xlane.f32.xlu0 %v181
    %v184 = vpop.xlane.xlu0 %183
    %185 = vmax.xlane.f32.xlu0 %v182
    %v186 = vpop.xlane.xlu0 %185
    %v187 = vsub.f32 %v146, %v184
    %v188 = vsub.f32 %v147, %v186
    %v189 = vmul.f32 %v187, 1.442695
    %v190 = vpow.pop %v189
    %v191 = vmul.f32 %v188, 1.442695
    %v192 = vpow.pop %v191
    %v193 = vsel %vm179, %v190, 0.0
    %v194 = vsel %vm180, %v192, 0.0
    %195 = vadd.xlane.f32.xlu0 %v193
    %v196 = vpop.xlane.xlu0 %195
    %197 = vadd.xlane.f32.xlu0 %v194
    %v198 = vpop.xlane.xlu0 %197
    %v199 = vlog2.pop %v196
    %v200 = vmul.f32 %v199, 0.6931472
    %v201 = vlog2.pop %v198
    %v202 = vmul.f32 %v201, 0.6931472
    %v203 = vsub.f32 %v187, %v200
    %v204 = vsub.f32 %v188, %v202
    %v205 = vsel %vm179, %v177, 0.0
    %v206 = vsel %vm180, %v178, 0.0
    %v207 = vmul.f32 %v205, %v203
    %v208 = vmul.f32 %v206, %v204
    %209 = vadd.xlane.f32.xlu0 %v207
    %v210 = vpop.xlane.xlu0 %209
    %211 = vadd.xlane.f32.xlu0 %v208
    %v212 = vpop.xlane.xlu0 %211
    %213 = vadd.xlane.f32.xlu0 %v205
    %v214 = vpop.xlane.xlu0 %213
    %215 = vadd.xlane.f32.xlu0 %v206
    %v216 = vpop.xlane.xlu0 %215
    %v217 = vrcp.pop %v214
    %v218 = vmul.f32 %v210, %v217
    %v219 = vrcp.pop %v216
    %v220 = vmul.f32 %v212, %v219
    %221 = vst [vmem:[#allocation5] sm:$0xff] %v218
    %222 = vst [vmem:[#allocation5 + $0x8] sm:$0xff] %v220
    // Predicated region
    $region22: #{tpu_custom_call.1} parent=1 // pred_check
      _
    $region23: #{tpu_custom_call.1} parent=1 // pred_check_branch
      %224 = sbr.rel (0) target = $region25
    $region24: #{tpu_custom_call.1} parent=1 // pred_region
      %s226 = ssub.s32 256, 256
      %227 = vsyncadd [#allocation4], %s226
      %s228 = sshll.u32 [#allocation5], 4
      %s229 = int_to_ptr.vmem [resolvable:$true] %s228
      %234 = dma.vmem_to_hbm [thread:$0]  %s229, 256, %s4, [#allocation4], 128, 128, 8
    $region25: #{tpu_custom_call.1} parent=1 // pred_fallthru
      _
    // Predicated region
    $region26: #{tpu_custom_call.1} parent=1 // pred_check
      _
    $region27: #{tpu_custom_call.1} parent=1 // pred_check_branch
      %236 = sbr.rel (0) target = $region29
    $region28: #{tpu_custom_call.1} parent=1 // pred_region
      %237 = dma.done [#allocation4], 256
    $region29: #{tpu_custom_call.1} parent=1 // pred_fallthru
      _
    %238 = vsyncpa [#allocation3], 1
    %239 = vsyncpa [#allocation4], 1

</llo_original>
